<compile_context>
chip_gen: v5e
topology: v5e:2x2
jax: 0.10.0
libtpu: 0.0.40
codegen_flags: <defaults>
</compile_context>

<pallas_src>
import jax
import jax.numpy as jnp
from jax.experimental import pallas as pl
from jax.experimental.pallas import tpu as pltpu

EMBED_DIMENSION = 300
EMBED_MAX_NORM = 1.0
_RENORM_EPS = 1e-7  # matches torch.embedding_renorm_ epsilon


def _round_up(x, m):
    return ((x + m - 1) // m) * m


def gemv_kernel(mean_ref, w_ref, scale_ref, b_ref, out_ref):
    # mean_ref : (B, D)   f32, resident across all vocab tiles (constant index_map)
    # w_ref    : (D, tv)  int8 (or bf16) weight tile in (D, V) layout
    # scale_ref: (1, tv)  f32 per-vocab-column dequant scale (ones for bf16 weights)
    # b_ref    : (1, tv)  f32 bias slice
    # out_ref  : (B, tv)  f32 logits tile (lane-dense over the vocab axis)
    x = mean_ref[...].astype(jnp.bfloat16)
    w = w_ref[...].astype(jnp.bfloat16)  # int8 -> bf16 cast; scale folded into the epilogue
    logits = jnp.dot(x, w, preferred_element_type=jnp.float32)   # plain NN matmul on D
    out_ref[...] = logits * scale_ref[...] + b_ref[...]


def prepare_cbow_params(emb_table, lin_w, lin_b, *, tv=8192, quantize_int8=True):
    """One-time model prep: transpose the linear weight to (D, V), optionally
    int8-quantize it per vocab column, and pad the vocab axis to a tile multiple."""
    V, D = lin_w.shape
    tv = min(tv, _round_up(V, 128))          # small-vocab case: single lane-dense tile
    Vp = _round_up(V, tv)                    # handles V not a multiple of tv
    pad = Vp - V

    w_t = jnp.asarray(lin_w, jnp.float32).T  # (D, V): transpose ONCE at load time
    if quantize_int8:
        absmax = jnp.max(jnp.abs(w_t), axis=0)                       # (V,)
        scale = jnp.where(absmax > 0, absmax / 127.0, 1.0)
        w_q = jnp.clip(jnp.round(w_t / scale[None, :]), -127, 127).astype(jnp.int8)
    else:
        scale = jnp.ones((V,), jnp.float32)
        w_q = w_t.astype(jnp.bfloat16)

    w_q = jnp.pad(w_q, ((0, 0), (0, pad)))
    scale = jnp.pad(scale.astype(jnp.float32), (0, pad)).reshape(1, Vp)
    bias = jnp.pad(jnp.asarray(lin_b, jnp.float32), (0, pad)).reshape(1, Vp)
    return dict(emb_table=emb_table, w=w_q, scale=scale, bias=bias, V=V, tv=tv)


def cbow_forward(indices, params):
    """indices: (B, C) int32; params from prepare_cbow_params."""
    emb_table = params["emb_table"]
    w, scale, bias = params["w"], params["scale"], params["bias"]
    V, tv = params["V"], params["tv"]
    B, _ = indices.shape
    D, Vp = w.shape

    # Embedding gather + max_norm renorm + context mean, in plain jnp (tiny).
    # TODO(synk): PyTorch's max_norm renormalizes the embedding *table* rows in
    # place as a lookup side effect; here only the gathered copies are renormed
    # (forward logits are identical, the table mutation is not replicated).
    emb = jnp.take(emb_table, indices, axis=0).astype(jnp.float32)        # (B, C, D)
    n = jnp.sqrt(jnp.sum(emb * emb, axis=-1, keepdims=True))
    emb = jnp.where(n > EMBED_MAX_NORM, emb * (EMBED_MAX_NORM / (n + _RENORM_EPS)), emb)
    mean = jnp.mean(emb, axis=1)                                          # (B, D) f32

    cost = pl.CostEstimate(
        flops=2 * B * D * Vp,
        transcendentals=0,
        bytes_accessed=(D * Vp * w.dtype.itemsize   # weight stream (dominant)
                        + B * Vp * 4                # logits out
                        + B * D * 4 + 2 * Vp * 4),  # mean + scale + bias
    )

    # Streaming GEMV over the (D, Vp) weight in large lane-dense vocab tiles.
    # No grid-carried scratch -> vocab axis is "parallel" (shards across both
    # TensorCores on v7x; no-op on v5e/v6e).
    logits = pl.pallas_call(
        gemv_kernel,
        out_shape=jax.ShapeDtypeStruct((B, Vp), jnp.float32),
        grid_spec=pltpu.PrefetchScalarGridSpec(
            num_scalar_prefetch=0,
            grid=(Vp // tv,),
            in_specs=[
                pl.BlockSpec((B, D), lambda j: (0, 0)),    # mean: resident across tiles
                pl.BlockSpec((D, tv), lambda j: (0, j)),   # weight: streamed, (D, V) layout
                pl.BlockSpec((1, tv), lambda j: (0, j)),   # dequant scale slice
                pl.BlockSpec((1, tv), lambda j: (0, j)),   # bias slice
            ],
            out_specs=pl.BlockSpec((B, tv), lambda j: (0, j)),
        ),
        compiler_params=pltpu.CompilerParams(
            dimension_semantics=("parallel",),
            vmem_limit_bytes=32 * 1024 * 1024,
        ),
        cost_estimate=cost,
    )(mean, w, scale, bias)
    return logits[:, :V]


def ref_forward(indices, emb_table, w_dv, bias):
    """All-f32 reference matching the PyTorch forward; w_dv is (D, V)."""
    emb = jnp.take(emb_table, indices, axis=0).astype(jnp.float32)
    n = jnp.sqrt(jnp.sum(emb * emb, axis=-1, keepdims=True))
    emb = jnp.where(n > EMBED_MAX_NORM, emb * (EMBED_MAX_NORM / (n + _RENORM_EPS)), emb)
    x = jnp.mean(emb, axis=1)
    return x @ w_dv + bias


if __name__ == "__main__":
    VOCAB = 1000                     # deliberately NOT a multiple of the tile (exercises padding)
    B, C, D = 8, 4, EMBED_DIMENSION

    key = jax.random.PRNGKey(0)
    k_emb, k_w, k_b, k_idx = jax.random.split(key, 4)

    # nn.Embedding default init: N(0, 1)
    emb_table = jax.random.normal(k_emb, (VOCAB, D), dtype=jnp.float32)
    # nn.Linear default init: U(-1/sqrt(in), 1/sqrt(in))
    bound = 1.0 / (D ** 0.5)
    lin_w = jax.random.uniform(k_w, (VOCAB, D), minval=-bound, maxval=bound, dtype=jnp.float32)
    lin_b = jax.random.uniform(k_b, (VOCAB,), minval=-bound, maxval=bound, dtype=jnp.float32)
    indices = jax.random.randint(k_idx, (B, C), 0, VOCAB, dtype=jnp.int32)

    # One-time model prep: (D, V) layout + int8 weight stream + vocab padding.
    params = prepare_cbow_params(emb_table, lin_w, lin_b, tv=8192, quantize_int8=True)

    out = jax.block_until_ready(cbow_forward(indices, params))
    assert out.shape == (B, VOCAB)

    # Reference uses the *dequantized effective* weights so the check isolates
    # kernel error (bf16 MXU matmul) from the int8 model-prep decision.
    w_eff = params["w"][:, :VOCAB].astype(jnp.float32) * params["scale"][0, :VOCAB]
    ref = jax.block_until_ready(ref_forward(indices, emb_table, w_eff, lin_b))
    assert jnp.allclose(out, ref, atol=5e-3, rtol=5e-2), "mismatch vs reference"

    print("KERNEL_OK")
</pallas_src>

<mosaic_0001>
module attributes {stable_mosaic.version = 11 : i64} {
  func.func @gemv_kernel(%arg0: i32, %arg1: memref<8x300xf32, #tpu.memory_space<vmem>>, %arg2: memref<300x1024xi8, #tpu.memory_space<vmem>>, %arg3: memref<1x1024xf32, #tpu.memory_space<vmem>>, %arg4: memref<1x1024xf32, #tpu.memory_space<vmem>>, %arg5: memref<8x1024xf32, #tpu.memory_space<vmem>>) attributes {dimension_semantics = [#tpu.dimension_semantics<parallel>], iteration_bounds = array<i64: 1>, scalar_prefetch = 0 : i64, scratch_operands = 0 : i64, tpu.core_type = #tpu.core_type<tc>, window_params = [{pipeline_mode = #tpu.pipeline_mode<synchronous>, transform_indices = @transform_0, window_bounds = array<i64: 8, 300>}, {transform_indices = @transform_1, window_bounds = array<i64: 300, 1024>}, {transform_indices = @transform_2, window_bounds = array<i64: 1, 1024>}, {transform_indices = @transform_3, window_bounds = array<i64: 1, 1024>}, {transform_indices = @transform_4, window_bounds = array<i64: 8, 1024>}]} {
    %c0 = arith.constant 0 : index
    %c0_0 = arith.constant 0 : index
    %0 = vector.load %arg1[%c0, %c0_0] : memref<8x300xf32, #tpu.memory_space<vmem>>, vector<8x300xf32>
    %1 = arith.truncf %0 : vector<8x300xf32> to vector<8x300xbf16>
    %c0_1 = arith.constant 0 : index
    %c0_2 = arith.constant 0 : index
    %2 = vector.load %arg2[%c0_1, %c0_2] : memref<300x1024xi8, #tpu.memory_space<vmem>>, vector<300x1024xi8>
    %3 = arith.sitofp %2 : vector<300x1024xi8> to vector<300x1024xbf16>
    %cst = arith.constant dense<0.000000e+00> : vector<8x1024xf32>
    %4 = tpu.matmul %1, %3, %cst {dimension_numbers = #tpu.dot_dimension_numbers<[1], [0], [0], [1], [0, 0, 1, 1], [], []>} : vector<8x300xbf16>, vector<300x1024xbf16>, vector<8x1024xf32> -> vector<8x1024xf32>
    %c0_3 = arith.constant 0 : index
    %c0_4 = arith.constant 0 : index
    %5 = vector.load %arg3[%c0_3, %c0_4] : memref<1x1024xf32, #tpu.memory_space<vmem>>, vector<1x1024xf32>
    %6 = vector.broadcast %5 : vector<1x1024xf32> to vector<8x1024xf32>
    %7 = arith.mulf %4, %6 : vector<8x1024xf32>
    %c0_5 = arith.constant 0 : index
    %c0_6 = arith.constant 0 : index
    %8 = vector.load %arg4[%c0_5, %c0_6] : memref<1x1024xf32, #tpu.memory_space<vmem>>, vector<1x1024xf32>
    %9 = vector.broadcast %8 : vector<1x1024xf32> to vector<8x1024xf32>
    %10 = arith.addf %7, %9 : vector<8x1024xf32>
    %c0_7 = arith.constant 0 : index
    %c0_8 = arith.constant 0 : index
    %11 = vector.load %arg5[%c0_7, %c0_8] : memref<8x1024xf32, #tpu.memory_space<vmem>>, vector<8x1024xf32>
    tpu.vector_store %arg5[%c0_7, %c0_8], %10 {strides = array<i32>} : memref<8x1024xf32, #tpu.memory_space<vmem>>, vector<8x1024xf32>,
    return
  }
  func.func @transform_0(%arg0: i32) -> (i32, i32) {
    %c0_i32 = arith.constant 0 : i32
    %c0_i32_0 = arith.constant 0 : i32
    %c0_i32_1 = arith.constant 0 : i32
    return %c0_i32, %c0_i32_0 : i32, i32
  }
  func.func @transform_1(%arg0: i32) -> (i32, i32) {
    %c0_i32 = arith.constant 0 : i32
    %c0_i32_0 = arith.constant 0 : i32
    return %c0_i32, %arg0 : i32, i32
  }
  func.func @transform_2(%arg0: i32) -> (i32, i32) {
    %c0_i32 = arith.constant 0 : i32
    %c0_i32_0 = arith.constant 0 : i32
    return %c0_i32, %arg0 : i32, i32
  }
  func.func @transform_3(%arg0: i32) -> (i32, i32) {
    %c0_i32 = arith.constant 0 : i32
    %c0_i32_0 = arith.constant 0 : i32
    return %c0_i32, %arg0 : i32, i32
  }
  func.func @transform_4(%arg0: i32) -> (i32, i32) {
    %c0_i32 = arith.constant 0 : i32
    %c0_i32_0 = arith.constant 0 : i32
    return %c0_i32, %arg0 : i32, i32
  }
}

</mosaic_0001>

<llo_original>
// kernel: tpu_custom_call.1
$region0: #{tpu_custom_call.1}
  #allocation0 [shape = 'u32[]', space=smem, size = 0x4, offset = 0x4, fixed_abs, tag = 'smem constant byte address 0x4 - core index']
  #allocation1 [shape = 'u32[72,128]{1,0:T(1,128)}', space=vmem, size = 0x9000, scoped, tag = 'internal scratch']
  %s0 = inlined_call_operand.hbm [shape: f32[8,300], index: 0, kind: input, shape index: {}]
  %s1 = inlined_call_operand.hbm [shape: s8[300,1024], index: 1, kind: input, shape index: {}]
  %s2 = inlined_call_operand.hbm [shape: f32[1,1024], index: 2, kind: input, shape index: {}]
  %s3 = inlined_call_operand.hbm [shape: f32[1,1024], index: 3, kind: input, shape index: {}]
  %s4 = inlined_call_operand.hbm [shape: f32[8,1024], index: 4, kind: output, shape index: {}]
  %s5 = sld [smem:[#allocation0]]
  $region42: #{tpu_custom_call.1} parent=0
    _
  %s7 = ssub.s32 1, %s5
  %s8 = scalar_select 0, %s7, %s5
  $region1: #{tpu_custom_call.1} parent=0
    #allocation2 [shape = 'u8[12288]{0}', space=vmem, size = 0x3000, scoped, tag = 'input window, operand 0, single buffered']
    #allocation3 [shape = 's32[1]{0}', space=sflag, size = 0x4, scoped, tag = 'scoped memory for tpu_custom_call.1']
    #allocation4 [shape = 's32[1]{0}', space=sflag, size = 0x4, scoped, tag = 'scoped memory for tpu_custom_call.1']
    #allocation5 [shape = 'u8[311296]{0}', space=vmem, size = 0x4c000, scoped, tag = 'input window, operand 1, single buffered']
    #allocation6 [shape = 's32[1]{0}', space=sflag, size = 0x4, scoped, tag = 'scoped memory for tpu_custom_call.1']
    #allocation7 [shape = 'u8[4096]{0}', space=vmem, size = 0x1000, scoped, tag = 'input window, operand 2, single buffered']
    #allocation8 [shape = 'u8[4096]{0}', space=vmem, size = 0x1000, scoped, tag = 'input window, operand 3, single buffered']
    #allocation9 [shape = 's32[1]{0}', space=sflag, size = 0x4, scoped, tag = 'scoped memory for tpu_custom_call.1']
    #allocation10 [shape = 'u8[32768]{0}', space=vmem, size = 0x8000, scoped, tag = 'output window, operand 0, single buffered']
    %9 = vsyncpa [#allocation3], 0
    %10 = vsyncpa [#allocation6], 0
    %11 = vsyncpa [#allocation9], 0
    %12 = vsyncpa [#allocation4], 0
    // Predicated region
    $region2: #{tpu_custom_call.1} parent=1 // pred_check
      _
    $region3: #{tpu_custom_call.1} parent=1 // pred_check_branch
      %14 = sbr.rel (0) target = $region5
    $region4: #{tpu_custom_call.1} parent=1 // pred_region
      %16 = vsyncadd [#allocation3], 0
      %s18 = sshll.u32 %s0, 4
      %s19 = int_to_ptr.hbm [resolvable:$true] %s18
      %s20 = sshll.u32 [#allocation2], 4
      %s21 = int_to_ptr.vmem [resolvable:$true] %s20
      %23 = dma.hbm_to_vmem [thread:$0]  %s19, 384, %s21, [#allocation3]
    $region5: #{tpu_custom_call.1} parent=1 // pred_fallthru
      _
    // Predicated region
    $region6: #{tpu_custom_call.1} parent=1 // pred_check
      _
    $region7: #{tpu_custom_call.1} parent=1 // pred_check_branch
      %25 = sbr.rel (0) target = $region9
    $region8: #{tpu_custom_call.1} parent=1 // pred_region
      %27 = vsyncadd [#allocation6], 0
      %s28 = sshll.u32 %s1, 4
      %s29 = int_to_ptr.hbm [resolvable:$true] %s28
      %s30 = sshll.u32 [#allocation5], 4
      %s31 = int_to_ptr.vmem [resolvable:$true] %s30
      %36 = dma.hbm_to_vmem [thread:$0]  %s29, 9728, %s31, [#allocation6], 256, 256, 16
    $region9: #{tpu_custom_call.1} parent=1 // pred_fallthru
      _
    // Predicated region
    $region10: #{tpu_custom_call.1} parent=1 // pred_check
      _
    $region11: #{tpu_custom_call.1} parent=1 // pred_check_branch
      %38 = sbr.rel (0) target = $region13
    $region12: #{tpu_custom_call.1} parent=1 // pred_region
      %40 = vsyncadd [#allocation6], 0
      %s42 = sshll.u32 %s2, 4
      %s43 = int_to_ptr.hbm [resolvable:$true] %s42
      %s44 = sshll.u32 [#allocation7], 4
      %s45 = int_to_ptr.vmem [resolvable:$true] %s44
      %47 = dma.hbm_to_vmem [thread:$0]  %s43, 128, %s45, [#allocation6]
    $region13: #{tpu_custom_call.1} parent=1 // pred_fallthru
      _
    // Predicated region
    $region14: #{tpu_custom_call.1} parent=1 // pred_check
      _
    $region15: #{tpu_custom_call.1} parent=1 // pred_check_branch
      %49 = sbr.rel (0) target = $region17
    $region16: #{tpu_custom_call.1} parent=1 // pred_region
      %51 = vsyncadd [#allocation9], 0
      %s53 = sshll.u32 %s3, 4
      %s54 = int_to_ptr.hbm [resolvable:$true] %s53
      %s55 = sshll.u32 [#allocation8], 4
      %s56 = int_to_ptr.vmem [resolvable:$true] %s55
      %58 = dma.hbm_to_vmem [thread:$0]  %s54, 128, %s56, [#allocation9]
    $region17: #{tpu_custom_call.1} parent=1 // pred_fallthru
      _
    // Predicated region
    $region18: #{tpu_custom_call.1} parent=1 // pred_check
      _
    $region19: #{tpu_custom_call.1} parent=1 // pred_check_branch
      %60 = sbr.rel (0) target = $region21
    $region20: #{tpu_custom_call.1} parent=1 // pred_region
      %62 = dma.done [#allocation3], 384
    $region21: #{tpu_custom_call.1} parent=1 // pred_fallthru
      _
    // Predicated region
    $region22: #{tpu_custom_call.1} parent=1 // pred_check
      _
    $region23: #{tpu_custom_call.1} parent=1 // pred_check_branch
      %64 = sbr.rel (0) target = $region25
    $region24: #{tpu_custom_call.1} parent=1 // pred_region
      %66 = dma.done [#allocation6], 9728
    $region25: #{tpu_custom_call.1} parent=1 // pred_fallthru
      _
    // Predicated region
    $region26: #{tpu_custom_call.1} parent=1 // pred_check
      _
    $region27: #{tpu_custom_call.1} parent=1 // pred_check_branch
      %68 = sbr.rel (0) target = $region29
    $region28: #{tpu_custom_call.1} parent=1 // pred_region
      %70 = dma.done [#allocation6], 128
    $region29: #{tpu_custom_call.1} parent=1 // pred_fallthru
      _
    // Predicated region
    $region30: #{tpu_custom_call.1} parent=1 // pred_check
      _
    $region31: #{tpu_custom_call.1} parent=1 // pred_check_branch
      %72 = sbr.rel (0) target = $region33
    $region32: #{tpu_custom_call.1} parent=1 // pred_region
      %74 = dma.done [#allocation9], 128
    $region33: #{tpu_custom_call.1} parent=1 // pred_fallthru
      _
    %v76 = vld [vmem:[#allocation2] sm:$0xff]
    %v77 = vld [vmem:[#allocation2 + $0x8] sm:$0xff]
    %v78 = vld [vmem:[#allocation2 + $0x10] sm:$0xff]
    %v79 = vpack.c.bf16 %v76, %v76
    %v80 = vpack.c.bf16 %v77, %v77
    %v81 = vpack.c.bf16 %v78, %v78
    %v82 = vld [vmem:[#allocation5] sm:$0xff]
    %v83 = vld [vmem:[#allocation5 + $0x8] sm:$0xff]
    %v84 = vld [vmem:[#allocation5 + $0x10] sm:$0xff]
    %v85 = vld [vmem:[#allocation5 + $0x18] sm:$0xff]
    %v86 = vld [vmem:[#allocation5 + $0x20] sm:$0xff]
    %v87 = vld [vmem:[#allocation5 + $0x28] sm:$0xff]
    %v88 = vld [vmem:[#allocation5 + $0x30] sm:$0xff]
    %v89 = vld [vmem:[#allocation5 + $0x38] sm:$0xff]
    %v90 = vld [vmem:[#allocation5 + $0x40] sm:$0xff]
    %v91 = vld [vmem:[#allocation5 + $0x48] sm:$0xff]
    %v92 = vld [vmem:[#allocation5 + $0x50] sm:$0xff]
    %v93 = vld [vmem:[#allocation5 + $0x58] sm:$0xff]
    %v94 = vld [vmem:[#allocation5 + $0x60] sm:$0xff]
    %v95 = vld [vmem:[#allocation5 + $0x68] sm:$0xff]
    %v96 = vld [vmem:[#allocation5 + $0x70] sm:$0xff]
    %v97 = vld [vmem:[#allocation5 + $0x78] sm:$0xff]
    %v98 = vld [vmem:[#allocation5 + $0x80] sm:$0xff]
    %v99 = vld [vmem:[#allocation5 + $0x88] sm:$0xff]
    %v100 = vld [vmem:[#allocation5 + $0x90] sm:$0xff]
    %v101 = vld [vmem:[#allocation5 + $0x98] sm:$0xff]
    %v102 = vld [vmem:[#allocation5 + $0xa0] sm:$0xff]
    %v103 = vld [vmem:[#allocation5 + $0xa8] sm:$0xff]
    %v104 = vld [vmem:[#allocation5 + $0xb0] sm:$0xff]
    %v105 = vld [vmem:[#allocation5 + $0xb8] sm:$0xff]
    %v106 = vld [vmem:[#allocation5 + $0xc0] sm:$0xff]
    %v107 = vld [vmem:[#allocation5 + $0xc8] sm:$0xff]
    %v108 = vld [vmem:[#allocation5 + $0xd0] sm:$0xff]
    %v109 = vld [vmem:[#allocation5 + $0xd8] sm:$0xff]
    %v110 = vld [vmem:[#allocation5 + $0xe0] sm:$0xff]
    %v111 = vld [vmem:[#allocation5 + $0xe8] sm:$0xff]
    %v112 = vld [vmem:[#allocation5 + $0xf0] sm:$0xff]
    %v113 = vld [vmem:[#allocation5 + $0xf8] sm:$0xff]
    %v114 = vld [vmem:[#allocation5 + $0x100] sm:$0xff]
    %v115 = vld [vmem:[#allocation5 + $0x108] sm:$0xff]
    %v116 = vld [vmem:[#allocation5 + $0x110] sm:$0xff]
    %v117 = vld [vmem:[#allocation5 + $0x118] sm:$0xff]
    %v118 = vld [vmem:[#allocation5 + $0x120] sm:$0xff]
    %v119 = vld [vmem:[#allocation5 + $0x128] sm:$0xff]
    %v120 = vld [vmem:[#allocation5 + $0x130] sm:$0xff]
    %v121 = vld [vmem:[#allocation5 + $0x138] sm:$0xff]
    %v122 = vld [vmem:[#allocation5 + $0x140] sm:$0xff]
    %v123 = vld [vmem:[#allocation5 + $0x148] sm:$0xff]
    %v124 = vld [vmem:[#allocation5 + $0x150] sm:$0xff]
    %v125 = vld [vmem:[#allocation5 + $0x158] sm:$0xff]
    %v126 = vld [vmem:[#allocation5 + $0x160] sm:$0xff]
    %v127 = vld [vmem:[#allocation5 + $0x168] sm:$0xff]
    %v128 = vld [vmem:[#allocation5 + $0x170] sm:$0xff]
    %v129 = vld [vmem:[#allocation5 + $0x178] sm:$0xff]
    %v130 = vld [vmem:[#allocation5 + $0x180] sm:$0xff]
    %v131 = vld [vmem:[#allocation5 + $0x188] sm:$0xff]
    %v132 = vld [vmem:[#allocation5 + $0x190] sm:$0xff]
    %v133 = vld [vmem:[#allocation5 + $0x198] sm:$0xff]
    %v134 = vld [vmem:[#allocation5 + $0x1a0] sm:$0xff]
    %v135 = vld [vmem:[#allocation5 + $0x1a8] sm:$0xff]
    %v136 = vld [vmem:[#allocation5 + $0x1b0] sm:$0xff]
    %v137 = vld [vmem:[#allocation5 + $0x1b8] sm:$0xff]
    %v138 = vld [vmem:[#allocation5 + $0x1c0] sm:$0xff]
    %v139 = vld [vmem:[#allocation5 + $0x1c8] sm:$0xff]
    %v140 = vld [vmem:[#allocation5 + $0x1d0] sm:$0xff]
    %v141 = vld [vmem:[#allocation5 + $0x1d8] sm:$0xff]
    %v142 = vld [vmem:[#allocation5 + $0x1e0] sm:$0xff]
    %v143 = vld [vmem:[#allocation5 + $0x1e8] sm:$0xff]
    %v144 = vld [vmem:[#allocation5 + $0x1f0] sm:$0xff]
    %v145 = vld [vmem:[#allocation5 + $0x1f8] sm:$0xff]
    %v146 = vld [vmem:[#allocation5 + $0x200] sm:$0xff]
    %v147 = vld [vmem:[#allocation5 + $0x208] sm:$0xff]
    %v148 = vld [vmem:[#allocation5 + $0x210] sm:$0xff]
    %v149 = vld [vmem:[#allocation5 + $0x218] sm:$0xff]
    %v150 = vld [vmem:[#allocation5 + $0x220] sm:$0xff]
    %v151 = vld [vmem:[#allocation5 + $0x228] sm:$0xff]
    %v152 = vld [vmem:[#allocation5 + $0x230] sm:$0xff]
    %v153 = vld [vmem:[#allocation5 + $0x238] sm:$0xff]
    %v154 = vld [vmem:[#allocation5 + $0x240] sm:$0xff]
    %v155 = vld [vmem:[#allocation5 + $0x248] sm:$0xff]
    %v156 = vld [vmem:[#allocation5 + $0x250] sm:$0x55]
    %v157 = vld [vmem:[#allocation5 + $0x258] sm:$0x55]
    %v158 = vunpack.c.0.s8 %v82
    %v159 = vunpack.c.1.s8 %v82
    %v160 = vunpack.c.2.s8 %v82
    %v161 = vunpack.c.3.s8 %v82
    %v162 = vunpack.c.0.s8 %v83
    %v163 = vunpack.c.1.s8 %v83
    %v164 = vunpack.c.2.s8 %v83
    %v165 = vunpack.c.3.s8 %v83
    %v166 = vunpack.c.0.s8 %v84
    %v167 = vunpack.c.1.s8 %v84
    %v168 = vunpack.c.2.s8 %v84
    %v169 = vunpack.c.3.s8 %v84
    %v170 = vunpack.c.0.s8 %v85
    %v171 = vunpack.c.1.s8 %v85
    %v172 = vunpack.c.2.s8 %v85
    %v173 = vunpack.c.3.s8 %v85
    %v174 = vunpack.c.0.s8 %v86
    %v175 = vunpack.c.1.s8 %v86
    %v176 = vunpack.c.2.s8 %v86
    %v177 = vunpack.c.3.s8 %v86
    %v178 = vunpack.c.0.s8 %v87
    %v179 = vunpack.c.1.s8 %v87
    %v180 = vunpack.c.2.s8 %v87
    %v181 = vunpack.c.3.s8 %v87
    %v182 = vunpack.c.0.s8 %v88
    %v183 = vunpack.c.1.s8 %v88
    %v184 = vunpack.c.2.s8 %v88
    %v185 = vunpack.c.3.s8 %v88
    %v186 = vunpack.c.0.s8 %v89
    %v187 = vunpack.c.1.s8 %v89
    %v188 = vunpack.c.2.s8 %v89
    %v189 = vunpack.c.3.s8 %v89
    %v190 = vunpack.c.0.s8 %v90
    %v191 = vunpack.c.1.s8 %v90
    %v192 = vunpack.c.2.s8 %v90
    %v193 = vunpack.c.3.s8 %v90
    %v194 = vunpack.c.0.s8 %v91
    %v195 = vunpack.c.1.s8 %v91
    %v196 = vunpack.c.2.s8 %v91
    %v197 = vunpack.c.3.s8 %v91
    %v198 = vunpack.c.0.s8 %v92
    %v199 = vunpack.c.1.s8 %v92
    %v200 = vunpack.c.2.s8 %v92
    %v201 = vunpack.c.3.s8 %v92
    %v202 = vunpack.c.0.s8 %v93
    %v203 = vunpack.c.1.s8 %v93
    %v204 = vunpack.c.2.s8 %v93
    %v205 = vunpack.c.3.s8 %v93
    %v206 = vunpack.c.0.s8 %v94
    %v207 = vunpack.c.1.s8 %v94
    %v208 = vunpack.c.2.s8 %v94
    %v209 = vunpack.c.3.s8 %v94
    %v210 = vunpack.c.0.s8 %v95
    %v211 = vunpack.c.1.s8 %v95
    %v212 = vunpack.c.2.s8 %v95
    %v213 = vunpack.c.3.s8 %v95
    %v214 = vunpack.c.0.s8 %v96
    %v215 = vunpack.c.1.s8 %v96
    %v216 = vunpack.c.2.s8 %v96
    %v217 = vunpack.c.3.s8 %v96
    %v218 = vunpack.c.0.s8 %v97
    %v219 = vunpack.c.1.s8 %v97
    %v220 = vunpack.c.2.s8 %v97
    %v221 = vunpack.c.3.s8 %v97
    %v222 = vunpack.c.0.s8 %v98
    %v223 = vunpack.c.1.s8 %v98
    %v224 = vunpack.c.2.s8 %v98
    %v225 = vunpack.c.3.s8 %v98
    %v226 = vunpack.c.0.s8 %v99
    %v227 = vunpack.c.1.s8 %v99
    %v228 = vunpack.c.2.s8 %v99
    %v229 = vunpack.c.3.s8 %v99
    %v230 = vunpack.c.0.s8 %v100
    %v231 = vunpack.c.1.s8 %v100
    %v232 = vunpack.c.2.s8 %v100
    %v233 = vunpack.c.3.s8 %v100
    %v234 = vunpack.c.0.s8 %v101
    %v235 = vunpack.c.1.s8 %v101
    %v236 = vunpack.c.2.s8 %v101
    %v237 = vunpack.c.3.s8 %v101
    %v238 = vunpack.c.0.s8 %v102
    %v239 = vunpack.c.1.s8 %v102
    %v240 = vunpack.c.2.s8 %v102
    %v241 = vunpack.c.3.s8 %v102
    %v242 = vunpack.c.0.s8 %v103
    %v243 = vunpack.c.1.s8 %v103
    %v244 = vunpack.c.2.s8 %v103
    %v245 = vunpack.c.3.s8 %v103
    %v246 = vunpack.c.0.s8 %v104
    %v247 = vunpack.c.1.s8 %v104
    %v248 = vunpack.c.2.s8 %v104
    %v249 = vunpack.c.3.s8 %v104
    %v250 = vunpack.c.0.s8 %v105
    %v251 = vunpack.c.1.s8 %v105
    %v252 = vunpack.c.2.s8 %v105
    %v253 = vunpack.c.3.s8 %v105
    %v254 = vunpack.c.0.s8 %v106
    %v255 = vunpack.c.1.s8 %v106
    %v256 = vunpack.c.2.s8 %v106
    %v257 = vunpack.c.3.s8 %v106
    %v258 = vunpack.c.0.s8 %v107
    %v259 = vunpack.c.1.s8 %v107
    %v260 = vunpack.c.2.s8 %v107
    %v261 = vunpack.c.3.s8 %v107
    %v262 = vunpack.c.0.s8 %v108
    %v263 = vunpack.c.1.s8 %v108
    %v264 = vunpack.c.2.s8 %v108
    %v265 = vunpack.c.3.s8 %v108
    %v266 = vunpack.c.0.s8 %v109
    %v267 = vunpack.c.1.s8 %v109
    %v268 = vunpack.c.2.s8 %v109
    %v269 = vunpack.c.3.s8 %v109
    %v270 = vunpack.c.0.s8 %v110
    %v271 = vunpack.c.1.s8 %v110
    %v272 = vunpack.c.2.s8 %v110
    %v273 = vunpack.c.3.s8 %v110
    %v274 = vunpack.c.0.s8 %v111
    %v275 = vunpack.c.1.s8 %v111
    %v276 = vunpack.c.2.s8 %v111
    %v277 = vunpack.c.3.s8 %v111
    %v278 = vunpack.c.0.s8 %v112
    %v279 = vunpack.c.1.s8 %v112
    %v280 = vunpack.c.2.s8 %v112
    %v281 = vunpack.c.3.s8 %v112
    %v282 = vunpack.c.0.s8 %v113
    %v283 = vunpack.c.1.s8 %v113
    %v284 = vunpack.c.2.s8 %v113
    %v285 = vunpack.c.3.s8 %v113
    %v286 = vunpack.c.0.s8 %v114
    %v287 = vunpack.c.1.s8 %v114
    %v288 = vunpack.c.2.s8 %v114
    %v289 = vunpack.c.3.s8 %v114
    %v290 = vunpack.c.0.s8 %v115
    %v291 = vunpack.c.1.s8 %v115
    %v292 = vunpack.c.2.s8 %v115
    %v293 = vunpack.c.3.s8 %v115
    %v294 = vunpack.c.0.s8 %v116
    %v295 = vunpack.c.1.s8 %v116
    %v296 = vunpack.c.2.s8 %v116
    %v297 = vunpack.c.3.s8 %v116
    %v298 = vunpack.c.0.s8 %v117
    %v299 = vunpack.c.1.s8 %v117
    %v300 = vunpack.c.2.s8 %v117
    %v301 = vunpack.c.3.s8 %v117
    %v302 = vunpack.c.0.s8 %v118
    %v303 = vunpack.c.1.s8 %v118
    %v304 = vunpack.c.2.s8 %v118
    %v305 = vunpack.c.3.s8 %v118
    %v306 = vunpack.c.0.s8 %v119
    %v307 = vunpack.c.1.s8 %v119
    %v308 = vunpack.c.2.s8 %v119
    %v309 = vunpack.c.3.s8 %v119
    %v310 = vunpack.c.0.s8 %v120
    %v311 = vunpack.c.1.s8 %v120
    %v312 = vunpack.c.2.s8 %v120
    %v313 = vunpack.c.3.s8 %v120
    %v314 = vunpack.c.0.s8 %v121
    %v315 = vunpack.c.1.s8 %v121
    %v316 = vunpack.c.2.s8 %v121
    %v317 = vunpack.c.3.s8 %v121
    %v318 = vunpack.c.0.s8 %v122
    %v319 = vunpack.c.1.s8 %v122
    %v320 = vunpack.c.2.s8 %v122
    %v321 = vunpack.c.3.s8 %v122
    %v322 = vunpack.c.0.s8 %v123
    %v323 = vunpack.c.1.s8 %v123
    %v324 = vunpack.c.2.s8 %v123
    %v325 = vunpack.c.3.s8 %v123
    %v326 = vunpack.c.0.s8 %v124
    %v327 = vunpack.c.1.s8 %v124
    %v328 = vunpack.c.2.s8 %v124
    %v329 = vunpack.c.3.s8 %v124
    %v330 = vunpack.c.0.s8 %v125
    %v331 = vunpack.c.1.s8 %v125
    %v332 = vunpack.c.2.s8 %v125
    %v333 = vunpack.c.3.s8 %v125
    %v334 = vunpack.c.0.s8 %v126
    %v335 = vunpack.c.1.s8 %v126
    %v336 = vunpack.c.2.s8 %v126
    %v337 = vunpack.c.3.s8 %v126
    %v338 = vunpack.c.0.s8 %v127
    %v339 = vunpack.c.1.s8 %v127
    %v340 = vunpack.c.2.s8 %v127
    %v341 = vunpack.c.3.s8 %v127
    %v342 = vunpack.c.0.s8 %v128
    %v343 = vunpack.c.1.s8 %v128
    %v344 = vunpack.c.2.s8 %v128
    %v345 = vunpack.c.3.s8 %v128
    %v346 = vunpack.c.0.s8 %v129
    %v347 = vunpack.c.1.s8 %v129
    %v348 = vunpack.c.2.s8 %v129
    %v349 = vunpack.c.3.s8 %v129
    %v350 = vunpack.c.0.s8 %v130
    %v351 = vunpack.c.1.s8 %v130
    %v352 = vunpack.c.2.s8 %v130
    %v353 = vunpack.c.3.s8 %v130
    %v354 = vunpack.c.0.s8 %v131
    %v355 = vunpack.c.1.s8 %v131
    %v356 = vunpack.c.2.s8 %v131
    %v357 = vunpack.c.3.s8 %v131
    %v358 = vunpack.c.0.s8 %v132
    %v359 = vunpack.c.1.s8 %v132
    %v360 = vunpack.c.2.s8 %v132
    %v361 = vunpack.c.3.s8 %v132
    %v362 = vunpack.c.0.s8 %v133
    %v363 = vunpack.c.1.s8 %v133
    %v364 = vunpack.c.2.s8 %v133
    %v365 = vunpack.c.3.s8 %v133
    %v366 = vunpack.c.0.s8 %v134
    %v367 = vunpack.c.1.s8 %v134
    %v368 = vunpack.c.2.s8 %v134
    %v369 = vunpack.c.3.s8 %v134
    %v370 = vunpack.c.0.s8 %v135
    %v371 = vunpack.c.1.s8 %v135
    %v372 = vunpack.c.2.s8 %v135
    %v373 = vunpack.c.3.s8 %v135
    %v374 = vunpack.c.0.s8 %v136
    %v375 = vunpack.c.1.s8 %v136
    %v376 = vunpack.c.2.s8 %v136
    %v377 = vunpack.c.3.s8 %v136
    %v378 = vunpack.c.0.s8 %v137
    %v379 = vunpack.c.1.s8 %v137
    %v380 = vunpack.c.2.s8 %v137
    %v381 = vunpack.c.3.s8 %v137
    %v382 = vunpack.c.0.s8 %v138
    %v383 = vunpack.c.1.s8 %v138
    %v384 = vunpack.c.2.s8 %v138
    %v385 = vunpack.c.3.s8 %v138
    %v386 = vunpack.c.0.s8 %v139
    %v387 = vunpack.c.1.s8 %v139
    %v388 = vunpack.c.2.s8 %v139
    %v389 = vunpack.c.3.s8 %v139
    %v390 = vunpack.c.0.s8 %v140
    %v391 = vunpack.c.1.s8 %v140
    %v392 = vunpack.c.2.s8 %v140
    %v393 = vunpack.c.3.s8 %v140
    %v394 = vunpack.c.0.s8 %v141
    %v395 = vunpack.c.1.s8 %v141
    %v396 = vunpack.c.2.s8 %v141
    %v397 = vunpack.c.3.s8 %v141
    %v398 = vunpack.c.0.s8 %v142
    %v399 = vunpack.c.1.s8 %v142
    %v400 = vunpack.c.2.s8 %v142
    %v401 = vunpack.c.3.s8 %v142
    %v402 = vunpack.c.0.s8 %v143
    %v403 = vunpack.c.1.s8 %v143
    %v404 = vunpack.c.2.s8 %v143
    %v405 = vunpack.c.3.s8 %v143
    %v406 = vunpack.c.0.s8 %v144
    %v407 = vunpack.c.1.s8 %v144
    %v408 = vunpack.c.2.s8 %v144
    %v409 = vunpack.c.3.s8 %v144
    %v410 = vunpack.c.0.s8 %v145
    %v411 = vunpack.c.1.s8 %v145
    %v412 = vunpack.c.2.s8 %v145
    %v413 = vunpack.c.3.s8 %v145
    %v414 = vunpack.c.0.s8 %v146
    %v415 = vunpack.c.1.s8 %v146
    %v416 = vunpack.c.2.s8 %v146
    %v417 = vunpack.c.3.s8 %v146
    %v418 = vunpack.c.0.s8 %v147
    %v419 = vunpack.c.1.s8 %v147
    %v420 = vunpack.c.2.s8 %v147
    %v421 = vunpack.c.3.s8 %v147
    %v422 = vunpack.c.0.s8 %v148
    %v423 = vunpack.c.1.s8 %v148
    %v424 = vunpack.c.2.s8 %v148
    %v425 = vunpack.c.3.s8 %v148
    %v426 = vunpack.c.0.s8 %v149
    %v427 = vunpack.c.1.s8 %v149
    %v428 = vunpack.c.2.s8 %v149
    %v429 = vunpack.c.3.s8 %v149
    %v430 = vunpack.c.0.s8 %v150
    %v431 = vunpack.c.1.s8 %v150
    %v432 = vunpack.c.2.s8 %v150
    %v433 = vunpack.c.3.s8 %v150
    %v434 = vunpack.c.0.s8 %v151
    %v435 = vunpack.c.1.s8 %v151
    %v436 = vunpack.c.2.s8 %v151
    %v437 = vunpack.c.3.s8 %v151
    %v438 = vunpack.c.0.s8 %v152
    %v439 = vunpack.c.1.s8 %v152
    %v440 = vunpack.c.2.s8 %v152
    %v441 = vunpack.c.3.s8 %v152
    %v442 = vunpack.c.0.s8 %v153
    %v443 = vunpack.c.1.s8 %v153
    %v444 = vunpack.c.2.s8 %v153
    %v445 = vunpack.c.3.s8 %v153
    %v446 = vunpack.c.0.s8 %v154
    %v447 = vunpack.c.1.s8 %v154
    %v448 = vunpack.c.2.s8 %v154
    %v449 = vunpack.c.3.s8 %v154
    %v450 = vunpack.c.0.s8 %v155
    %v451 = vunpack.c.1.s8 %v155
    %v452 = vunpack.c.2.s8 %v155
    %v453 = vunpack.c.3.s8 %v155
    %v454 = vunpack.c.0.s8 %v156
    %v455 = vunpack.c.1.s8 %v156
    %v456 = vunpack.c.2.s8 %v156
    %v457 = vunpack.c.3.s8 %v156
    %v458 = vunpack.c.0.s8 %v157
    %v459 = vunpack.c.1.s8 %v157
    %v460 = vunpack.c.2.s8 %v157
    %v461 = vunpack.c.3.s8 %v157
    %v462 = vcvt.s32.f32 %v158
    %v463 = vcvt.s32.f32 %v159
    %v464 = vcvt.s32.f32 %v160
    %v465 = vcvt.s32.f32 %v161
    %v466 = vcvt.s32.f32 %v162
    %v467 = vcvt.s32.f32 %v163
    %v468 = vcvt.s32.f32 %v164
    %v469 = vcvt.s32.f32 %v165
    %v470 = vcvt.s32.f32 %v166
    %v471 = vcvt.s32.f32 %v167
    %v472 = vcvt.s32.f32 %v168
    %v473 = vcvt.s32.f32 %v169
    %v474 = vcvt.s32.f32 %v170
    %v475 = vcvt.s32.f32 %v171
    %v476 = vcvt.s32.f32 %v172
    %v477 = vcvt.s32.f32 %v173
    %v478 = vcvt.s32.f32 %v174
    %v479 = vcvt.s32.f32 %v175
    %v480 = vcvt.s32.f32 %v176
    %v481 = vcvt.s32.f32 %v177
    %v482 = vcvt.s32.f32 %v178
    %v483 = vcvt.s32.f32 %v179
    %v484 = vcvt.s32.f32 %v180
    %v485 = vcvt.s32.f32 %v181
    %v486 = vcvt.s32.f32 %v182
    %v487 = vcvt.s32.f32 %v183
    %v488 = vcvt.s32.f32 %v184
    %v489 = vcvt.s32.f32 %v185
    %v490 = vcvt.s32.f32 %v186
    %v491 = vcvt.s32.f32 %v187
    %v492 = vcvt.s32.f32 %v188
    %v493 = vcvt.s32.f32 %v189
    %v494 = vcvt.s32.f32 %v190
    %v495 = vcvt.s32.f32 %v191
    %v496 = vcvt.s32.f32 %v192
    %v497 = vcvt.s32.f32 %v193
    %v498 = vcvt.s32.f32 %v194
    %v499 = vcvt.s32.f32 %v195
    %v500 = vcvt.s32.f32 %v196
    %v501 = vcvt.s32.f32 %v197
    %v502 = vcvt.s32.f32 %v198
    %v503 = vcvt.s32.f32 %v199
    %v504 = vcvt.s32.f32 %v200
    %v505 = vcvt.s32.f32 %v201
    %v506 = vcvt.s32.f32 %v202
    %v507 = vcvt.s32.f32 %v203
    %v508 = vcvt.s32.f32 %v204
    %v509 = vcvt.s32.f32 %v205
    %v510 = vcvt.s32.f32 %v206
    %v511 = vcvt.s32.f32 %v207
    %v512 = vcvt.s32.f32 %v208
    %v513 = vcvt.s32.f32 %v209
    %v514 = vcvt.s32.f32 %v210
    %v515 = vcvt.s32.f32 %v211
    %v516 = vcvt.s32.f32 %v212
    %v517 = vcvt.s32.f32 %v213
    %v518 = vcvt.s32.f32 %v214
    %v519 = vcvt.s32.f32 %v215
    %v520 = vcvt.s32.f32 %v216
    %v521 = vcvt.s32.f32 %v217
    %v522 = vcvt.s32.f32 %v218
    %v523 = vcvt.s32.f32 %v219
    %v524 = vcvt.s32.f32 %v220
    %v525 = vcvt.s32.f32 %v221
    %v526 = vcvt.s32.f32 %v222
    %v527 = vcvt.s32.f32 %v223
    %v528 = vcvt.s32.f32 %v224
    %v529 = vcvt.s32.f32 %v225
    %v530 = vcvt.s32.f32 %v226
    %v531 = vcvt.s32.f32 %v227
    %v532 = vcvt.s32.f32 %v228
    %v533 = vcvt.s32.f32 %v229
    %v534 = vcvt.s32.f32 %v230
    %v535 = vcvt.s32.f32 %v231
    %v536 = vcvt.s32.f32 %v232
    %v537 = vcvt.s32.f32 %v233
    %v538 = vcvt.s32.f32 %v234
    %v539 = vcvt.s32.f32 %v235
    %v540 = vcvt.s32.f32 %v236
    %v541 = vcvt.s32.f32 %v237
    %v542 = vcvt.s32.f32 %v238
    %v543 = vcvt.s32.f32 %v239
    %v544 = vcvt.s32.f32 %v240
    %v545 = vcvt.s32.f32 %v241
    %v546 = vcvt.s32.f32 %v242
    %v547 = vcvt.s32.f32 %v243
    %v548 = vcvt.s32.f32 %v244
    %v549 = vcvt.s32.f32 %v245
    %v550 = vcvt.s32.f32 %v246
    %v551 = vcvt.s32.f32 %v247
    %v552 = vcvt.s32.f32 %v248
    %v553 = vcvt.s32.f32 %v249
    %v554 = vcvt.s32.f32 %v250
    %v555 = vcvt.s32.f32 %v251
    %v556 = vcvt.s32.f32 %v252
    %v557 = vcvt.s32.f32 %v253
    %v558 = vcvt.s32.f32 %v254
    %v559 = vcvt.s32.f32 %v255
    %v560 = vcvt.s32.f32 %v256
    %v561 = vcvt.s32.f32 %v257
    %v562 = vcvt.s32.f32 %v258
    %v563 = vcvt.s32.f32 %v259
    %v564 = vcvt.s32.f32 %v260
    %v565 = vcvt.s32.f32 %v261
    %v566 = vcvt.s32.f32 %v262
    %v567 = vcvt.s32.f32 %v263
    %v568 = vcvt.s32.f32 %v264
    %v569 = vcvt.s32.f32 %v265
    %v570 = vcvt.s32.f32 %v266
    %v571 = vcvt.s32.f32 %v267
    %v572 = vcvt.s32.f32 %v268
    %v573 = vcvt.s32.f32 %v269
    %v574 = vcvt.s32.f32 %v270
    %v575 = vcvt.s32.f32 %v271
    %v576 = vcvt.s32.f32 %v272
    %v577 = vcvt.s32.f32 %v273
    %v578 = vcvt.s32.f32 %v274
    %v579 = vcvt.s32.f32 %v275
    %v580 = vcvt.s32.f32 %v276
    %v581 = vcvt.s32.f32 %v277
    %v582 = vcvt.s32.f32 %v278
    %v583 = vcvt.s32.f32 %v279
    %v584 = vcvt.s32.f32 %v280
    %v585 = vcvt.s32.f32 %v281
    %v586 = vcvt.s32.f32 %v282
    %v587 = vcvt.s32.f32 %v283
    %v588 = vcvt.s32.f32 %v284
    %v589 = vcvt.s32.f32 %v285
    %v590 = vcvt.s32.f32 %v286
    %v591 = vcvt.s32.f32 %v287
    %v592 = vcvt.s32.f32 %v288
    %v593 = vcvt.s32.f32 %v289
    %v594 = vcvt.s32.f32 %v290
    %v595 = vcvt.s32.f32 %v291
    %v596 = vcvt.s32.f32 %v292
    %v597 = vcvt.s32.f32 %v293
    %v598 = vcvt.s32.f32 %v294
    %v599 = vcvt.s32.f32 %v295
    %v600 = vcvt.s32.f32 %v296
    %v601 = vcvt.s32.f32 %v297
    %v602 = vcvt.s32.f32 %v298
    %v603 = vcvt.s32.f32 %v299
    %v604 = vcvt.s32.f32 %v300
    %v605 = vcvt.s32.f32 %v301
    %v606 = vcvt.s32.f32 %v302
    %v607 = vcvt.s32.f32 %v303
    %v608 = vcvt.s32.f32 %v304
    %v609 = vcvt.s32.f32 %v305
    %v610 = vcvt.s32.f32 %v306
    %v611 = vcvt.s32.f32 %v307
    %v612 = vcvt.s32.f32 %v308
    %v613 = vcvt.s32.f32 %v309
    %v614 = vcvt.s32.f32 %v310
    %v615 = vcvt.s32.f32 %v311
    %v616 = vcvt.s32.f32 %v312
    %v617 = vcvt.s32.f32 %v313
    %v618 = vcvt.s32.f32 %v314
    %v619 = vcvt.s32.f32 %v315
    %v620 = vcvt.s32.f32 %v316
    %v621 = vcvt.s32.f32 %v317
    %v622 = vcvt.s32.f32 %v318
    %v623 = vcvt.s32.f32 %v319
    %v624 = vcvt.s32.f32 %v320
    %v625 = vcvt.s32.f32 %v321
    %v626 = vcvt.s32.f32 %v322
    %v627 = vcvt.s32.f32 %v323
    %v628 = vcvt.s32.f32 %v324
    %v629 = vcvt.s32.f32 %v325
    %v630 = vcvt.s32.f32 %v326
    %v631 = vcvt.s32.f32 %v327
    %v632 = vcvt.s32.f32 %v328
    %v633 = vcvt.s32.f32 %v329
    %v634 = vcvt.s32.f32 %v330
    %v635 = vcvt.s32.f32 %v331
    %v636 = vcvt.s32.f32 %v332
    %v637 = vcvt.s32.f32 %v333
    %v638 = vcvt.s32.f32 %v334
    %v639 = vcvt.s32.f32 %v335
    %v640 = vcvt.s32.f32 %v336
    %v641 = vcvt.s32.f32 %v337
    %v642 = vcvt.s32.f32 %v338
    %v643 = vcvt.s32.f32 %v339
    %v644 = vcvt.s32.f32 %v340
    %v645 = vcvt.s32.f32 %v341
    %v646 = vcvt.s32.f32 %v342
    %v647 = vcvt.s32.f32 %v343
    %v648 = vcvt.s32.f32 %v344
    %v649 = vcvt.s32.f32 %v345
    %v650 = vcvt.s32.f32 %v346
    %v651 = vcvt.s32.f32 %v347
    %v652 = vcvt.s32.f32 %v348
    %v653 = vcvt.s32.f32 %v349
    %v654 = vcvt.s32.f32 %v350
    %v655 = vcvt.s32.f32 %v351
    %v656 = vcvt.s32.f32 %v352
    %v657 = vcvt.s32.f32 %v353
    %v658 = vcvt.s32.f32 %v354
    %v659 = vcvt.s32.f32 %v355
    %v660 = vcvt.s32.f32 %v356
    %v661 = vcvt.s32.f32 %v357
    %v662 = vcvt.s32.f32 %v358
    %v663 = vcvt.s32.f32 %v359
    %v664 = vcvt.s32.f32 %v360
    %v665 = vcvt.s32.f32 %v361
    %v666 = vcvt.s32.f32 %v362
    %v667 = vcvt.s32.f32 %v363
    %v668 = vcvt.s32.f32 %v364
    %v669 = vcvt.s32.f32 %v365
    %v670 = vcvt.s32.f32 %v366
    %v671 = vcvt.s32.f32 %v367
    %v672 = vcvt.s32.f32 %v368
    %v673 = vcvt.s32.f32 %v369
    %v674 = vcvt.s32.f32 %v370
    %v675 = vcvt.s32.f32 %v371
    %v676 = vcvt.s32.f32 %v372
    %v677 = vcvt.s32.f32 %v373
    %v678 = vcvt.s32.f32 %v374
    %v679 = vcvt.s32.f32 %v375
    %v680 = vcvt.s32.f32 %v376
    %v681 = vcvt.s32.f32 %v377
    %v682 = vcvt.s32.f32 %v378
    %v683 = vcvt.s32.f32 %v379
    %v684 = vcvt.s32.f32 %v380
    %v685 = vcvt.s32.f32 %v381
    %v686 = vcvt.s32.f32 %v382
    %v687 = vcvt.s32.f32 %v383
    %v688 = vcvt.s32.f32 %v384
    %v689 = vcvt.s32.f32 %v385
    %v690 = vcvt.s32.f32 %v386
    %v691 = vcvt.s32.f32 %v387
    %v692 = vcvt.s32.f32 %v388
    %v693 = vcvt.s32.f32 %v389
    %v694 = vcvt.s32.f32 %v390
    %v695 = vcvt.s32.f32 %v391
    %v696 = vcvt.s32.f32 %v392
    %v697 = vcvt.s32.f32 %v393
    %v698 = vcvt.s32.f32 %v394
    %v699 = vcvt.s32.f32 %v395
    %v700 = vcvt.s32.f32 %v396
    %v701 = vcvt.s32.f32 %v397
    %v702 = vcvt.s32.f32 %v398
    %v703 = vcvt.s32.f32 %v399
    %v704 = vcvt.s32.f32 %v400
    %v705 = vcvt.s32.f32 %v401
    %v706 = vcvt.s32.f32 %v402
    %v707 = vcvt.s32.f32 %v403
    %v708 = vcvt.s32.f32 %v404
    %v709 = vcvt.s32.f32 %v405
    %v710 = vcvt.s32.f32 %v406
    %v711 = vcvt.s32.f32 %v407
    %v712 = vcvt.s32.f32 %v408
    %v713 = vcvt.s32.f32 %v409
    %v714 = vcvt.s32.f32 %v410
    %v715 = vcvt.s32.f32 %v411
    %v716 = vcvt.s32.f32 %v412
    %v717 = vcvt.s32.f32 %v413
    %v718 = vcvt.s32.f32 %v414
    %v719 = vcvt.s32.f32 %v415
    %v720 = vcvt.s32.f32 %v416
    %v721 = vcvt.s32.f32 %v417
    %v722 = vcvt.s32.f32 %v418
    %v723 = vcvt.s32.f32 %v419
    %v724 = vcvt.s32.f32 %v420
    %v725 = vcvt.s32.f32 %v421
    %v726 = vcvt.s32.f32 %v422
    %v727 = vcvt.s32.f32 %v423
    %v728 = vcvt.s32.f32 %v424
    %v729 = vcvt.s32.f32 %v425
    %v730 = vcvt.s32.f32 %v426
    %v731 = vcvt.s32.f32 %v427
    %v732 = vcvt.s32.f32 %v428
    %v733 = vcvt.s32.f32 %v429
    %v734 = vcvt.s32.f32 %v430
    %v735 = vcvt.s32.f32 %v431
    %v736 = vcvt.s32.f32 %v432
    %v737 = vcvt.s32.f32 %v433
    %v738 = vcvt.s32.f32 %v434
    %v739 = vcvt.s32.f32 %v435
    %v740 = vcvt.s32.f32 %v436
    %v741 = vcvt.s32.f32 %v437
    %v742 = vcvt.s32.f32 %v438
    %v743 = vcvt.s32.f32 %v439
    %v744 = vcvt.s32.f32 %v440
    %v745 = vcvt.s32.f32 %v441
    %v746 = vcvt.s32.f32 %v442
    %v747 = vcvt.s32.f32 %v443
    %v748 = vcvt.s32.f32 %v444
    %v749 = vcvt.s32.f32 %v445
    %v750 = vcvt.s32.f32 %v446
    %v751 = vcvt.s32.f32 %v447
    %v752 = vcvt.s32.f32 %v448
    %v753 = vcvt.s32.f32 %v449
    %v754 = vcvt.s32.f32 %v450
    %v755 = vcvt.s32.f32 %v451
    %v756 = vcvt.s32.f32 %v452
    %v757 = vcvt.s32.f32 %v453
    %v758 = vcvt.s32.f32 %v454
    %v759 = vcvt.s32.f32 %v455
    %v760 = vcvt.s32.f32 %v456
    %v761 = vcvt.s32.f32 %v457
    %v762 = vcvt.s32.f32 %v458
    %v763 = vcvt.s32.f32 %v459
    %v764 = vcvt.s32.f32 %v460
    %v765 = vcvt.s32.f32 %v461
    %v766 = vpack.c.bf16 %v470, %v462
    %v767 = vpack.c.bf16 %v471, %v463
    %v768 = vpack.c.bf16 %v472, %v464
    %v769 = vpack.c.bf16 %v473, %v465
    %v770 = vpack.c.bf16 %v474, %v466
    %v771 = vpack.c.bf16 %v475, %v467
    %v772 = vpack.c.bf16 %v476, %v468
    %v773 = vpack.c.bf16 %v477, %v469
    %v774 = vpack.c.bf16 %v486, %v478
    %v775 = vpack.c.bf16 %v487, %v479
    %v776 = vpack.c.bf16 %v488, %v480
    %v777 = vpack.c.bf16 %v489, %v481
    %v778 = vpack.c.bf16 %v490, %v482
    %v779 = vpack.c.bf16 %v491, %v483
    %v780 = vpack.c.bf16 %v492, %v484
    %v781 = vpack.c.bf16 %v493, %v485
    %v782 = vpack.c.bf16 %v502, %v494
    %v783 = vpack.c.bf16 %v503, %v495
    %v784 = vpack.c.bf16 %v504, %v496
    %v785 = vpack.c.bf16 %v505, %v497
    %v786 = vpack.c.bf16 %v506, %v498
    %v787 = vpack.c.bf16 %v507, %v499
    %v788 = vpack.c.bf16 %v508, %v500
    %v789 = vpack.c.bf16 %v509, %v501
    %v790 = vpack.c.bf16 %v518, %v510
    %v791 = vpack.c.bf16 %v519, %v511
    %v792 = vpack.c.bf16 %v520, %v512
    %v793 = vpack.c.bf16 %v521, %v513
    %v794 = vpack.c.bf16 %v522, %v514
    %v795 = vpack.c.bf16 %v523, %v515
    %v796 = vpack.c.bf16 %v524, %v516
    %v797 = vpack.c.bf16 %v525, %v517
    %v798 = vpack.c.bf16 %v534, %v526
    %v799 = vpack.c.bf16 %v535, %v527
    %v800 = vpack.c.bf16 %v536, %v528
    %v801 = vpack.c.bf16 %v537, %v529
    %v802 = vpack.c.bf16 %v538, %v530
    %v803 = vpack.c.bf16 %v539, %v531
    %v804 = vpack.c.bf16 %v540, %v532
    %v805 = vpack.c.bf16 %v541, %v533
    %v806 = vpack.c.bf16 %v550, %v542
    %v807 = vpack.c.bf16 %v551, %v543
    %v808 = vpack.c.bf16 %v552, %v544
    %v809 = vpack.c.bf16 %v553, %v545
    %v810 = vpack.c.bf16 %v554, %v546
    %v811 = vpack.c.bf16 %v555, %v547
    %v812 = vpack.c.bf16 %v556, %v548
    %v813 = vpack.c.bf16 %v557, %v549
    %v814 = vpack.c.bf16 %v566, %v558
    %v815 = vpack.c.bf16 %v567, %v559
    %v816 = vpack.c.bf16 %v568, %v560
    %v817 = vpack.c.bf16 %v569, %v561
    %v818 = vpack.c.bf16 %v570, %v562
    %v819 = vpack.c.bf16 %v571, %v563
    %v820 = vpack.c.bf16 %v572, %v564
    %v821 = vpack.c.bf16 %v573, %v565
    %v822 = vpack.c.bf16 %v582, %v574
    %v823 = vpack.c.bf16 %v583, %v575
    %v824 = vpack.c.bf16 %v584, %v576
    %v825 = vpack.c.bf16 %v585, %v577
    %v826 = vpack.c.bf16 %v586, %v578
    %v827 = vpack.c.bf16 %v587, %v579
    %v828 = vpack.c.bf16 %v588, %v580
    %v829 = vpack.c.bf16 %v589, %v581
    %v830 = vpack.c.bf16 %v598, %v590
    %v831 = vpack.c.bf16 %v599, %v591
    %v832 = vpack.c.bf16 %v600, %v592
    %v833 = vpack.c.bf16 %v601, %v593
    %v834 = vpack.c.bf16 %v602, %v594
    %v835 = vpack.c.bf16 %v603, %v595
    %v836 = vpack.c.bf16 %v604, %v596
    %v837 = vpack.c.bf16 %v605, %v597
    %v838 = vpack.c.bf16 %v614, %v606
    %v839 = vpack.c.bf16 %v615, %v607
    %v840 = vpack.c.bf16 %v616, %v608
    %v841 = vpack.c.bf16 %v617, %v609
    %v842 = vpack.c.bf16 %v618, %v610
    %v843 = vpack.c.bf16 %v619, %v611
    %v844 = vpack.c.bf16 %v620, %v612
    %v845 = vpack.c.bf16 %v621, %v613
    %v846 = vpack.c.bf16 %v630, %v622
    %v847 = vpack.c.bf16 %v631, %v623
    %v848 = vpack.c.bf16 %v632, %v624
    %v849 = vpack.c.bf16 %v633, %v625
    %v850 = vpack.c.bf16 %v634, %v626
    %v851 = vpack.c.bf16 %v635, %v627
    %v852 = vpack.c.bf16 %v636, %v628
    %v853 = vpack.c.bf16 %v637, %v629
    %v854 = vpack.c.bf16 %v646, %v638
    %v855 = vpack.c.bf16 %v647, %v639
    %v856 = vpack.c.bf16 %v648, %v640
    %v857 = vpack.c.bf16 %v649, %v641
    %v858 = vpack.c.bf16 %v650, %v642
    %v859 = vpack.c.bf16 %v651, %v643
    %v860 = vpack.c.bf16 %v652, %v644
    %v861 = vpack.c.bf16 %v653, %v645
    %v862 = vpack.c.bf16 %v662, %v654
    %v863 = vpack.c.bf16 %v663, %v655
    %v864 = vpack.c.bf16 %v664, %v656
    %v865 = vpack.c.bf16 %v665, %v657
    %v866 = vpack.c.bf16 %v666, %v658
    %v867 = vpack.c.bf16 %v667, %v659
    %v868 = vpack.c.bf16 %v668, %v660
    %v869 = vpack.c.bf16 %v669, %v661
    %v870 = vpack.c.bf16 %v678, %v670
    %v871 = vpack.c.bf16 %v679, %v671
    %v872 = vpack.c.bf16 %v680, %v672
    %v873 = vpack.c.bf16 %v681, %v673
    %v874 = vpack.c.bf16 %v682, %v674
    %v875 = vpack.c.bf16 %v683, %v675
    %v876 = vpack.c.bf16 %v684, %v676
    %v877 = vpack.c.bf16 %v685, %v677
    %v878 = vpack.c.bf16 %v694, %v686
    %v879 = vpack.c.bf16 %v695, %v687
    %v880 = vpack.c.bf16 %v696, %v688
    %v881 = vpack.c.bf16 %v697, %v689
    %v882 = vpack.c.bf16 %v698, %v690
    %v883 = vpack.c.bf16 %v699, %v691
    %v884 = vpack.c.bf16 %v700, %v692
    %v885 = vpack.c.bf16 %v701, %v693
    %v886 = vpack.c.bf16 %v710, %v702
    %v887 = vpack.c.bf16 %v711, %v703
    %v888 = vpack.c.bf16 %v712, %v704
    %v889 = vpack.c.bf16 %v713, %v705
    %v890 = vpack.c.bf16 %v714, %v706
    %v891 = vpack.c.bf16 %v715, %v707
    %v892 = vpack.c.bf16 %v716, %v708
    %v893 = vpack.c.bf16 %v717, %v709
    %v894 = vpack.c.bf16 %v726, %v718
    %v895 = vpack.c.bf16 %v727, %v719
    %v896 = vpack.c.bf16 %v728, %v720
    %v897 = vpack.c.bf16 %v729, %v721
    %v898 = vpack.c.bf16 %v730, %v722
    %v899 = vpack.c.bf16 %v731, %v723
    %v900 = vpack.c.bf16 %v732, %v724
    %v901 = vpack.c.bf16 %v733, %v725
    %v902 = vpack.c.bf16 %v742, %v734
    %v903 = vpack.c.bf16 %v743, %v735
    %v904 = vpack.c.bf16 %v744, %v736
    %v905 = vpack.c.bf16 %v745, %v737
    %v906 = vpack.c.bf16 %v746, %v738
    %v907 = vpack.c.bf16 %v747, %v739
    %v908 = vpack.c.bf16 %v748, %v740
    %v909 = vpack.c.bf16 %v749, %v741
    %v910 = vpack.c.bf16 %v758, %v750
    %v911 = vpack.c.bf16 %v759, %v751
    %v912 = vpack.c.bf16 %v760, %v752
    %v913 = vpack.c.bf16 %v761, %v753
    %v914 = vpack.c.bf16 %v762, %v754
    %v915 = vpack.c.bf16 %v763, %v755
    %v916 = vpack.c.bf16 %v764, %v756
    %v917 = vpack.c.bf16 %v765, %v757
    %vm918 = vcmask 359424
    %v920 = vsel %vm918, %v81, 0
    %vm922 = vcmask 1045504
    %v924 = vsel %vm922, %v910, 0
    %v927 = vsel %vm922, %v911, 0
    %v930 = vsel %vm922, %v912, 0
    %v933 = vsel %vm922, %v913, 0
    %v936 = vsel %vm922, %v914, 0
    %v939 = vsel %vm922, %v915, 0
    %v942 = vsel %vm922, %v916, 0
    %v945 = vsel %vm922, %v917, 0
    %947 = vmatpush.bf16.msra.mxu0 %v822
    %948 = vmatpush.bf16.msra.mxu0 %v814
    %949 = vmatpush.bf16.msra.mxu0 %v806
    %950 = vmatpush.bf16.msra.mxu0 %v798
    %951 = vmatpush.bf16.msra.mxu0 %v790
    %952 = vmatpush.bf16.msra.mxu0 %v782
    %953 = vmatpush.bf16.msra.mxu0 %v774
    %954 = vmatpush.bf16.msra.mxu0 %v766
    %955 = vmatmul.bf16.gmra.mxu0 %v79
    %v956 = vpop.f32.mrf.mxu0
    %v957 = vadd.f32 0.0, %v956
    %v958 = vpop.f32.mrf.mxu0
    %959 = vdwg.mxu0
    %960 = vmatpush.bf16.msra.mxu0 %v886
    %961 = vmatpush.bf16.msra.mxu0 %v878
    %962 = vmatpush.bf16.msra.mxu0 %v870
    %963 = vmatpush.bf16.msra.mxu0 %v862
    %964 = vmatpush.bf16.msra.mxu0 %v854
    %965 = vmatpush.bf16.msra.mxu0 %v846
    %966 = vmatpush.bf16.msra.mxu0 %v838
    %967 = vmatpush.bf16.msra.mxu0 %v830
    %968 = vmatmul.bf16.gmra.mxu0 %v80
    %v969 = vpop.f32.mrf.mxu0
    %v970 = vadd.f32 %v957, %v969
    %v971 = vpop.f32.mrf.mxu0
    %972 = vdwg.mxu0
    %973 = vmatpush.bf16.msra.mxu0 0
    %974 = vmatpush.bf16.msra.mxu0 0
    %975 = vmatpush.bf16.msra.mxu0 0
    %976 = vmatpush.bf16.msra.mxu0 0
    %977 = vmatpush.bf16.msra.mxu0 0
    %978 = vmatpush.bf16.msra.mxu0 %v924
    %979 = vmatpush.bf16.msra.mxu0 %v902
    %980 = vmatpush.bf16.msra.mxu0 %v894
    %981 = vmatmul.bf16.gmra.mxu0 %v920
    %v982 = vpop.f32.mrf.mxu0
    %v983 = vadd.f32 %v970, %v982
    %v984 = vpop.f32.mrf.mxu0
    %985 = vdwg.mxu0
    %986 = vmatpush.bf16.msra.mxu0 %v823
    %987 = vmatpush.bf16.msra.mxu0 %v815
    %988 = vmatpush.bf16.msra.mxu0 %v807
    %989 = vmatpush.bf16.msra.mxu0 %v799
    %990 = vmatpush.bf16.msra.mxu0 %v791
    %991 = vmatpush.bf16.msra.mxu0 %v783
    %992 = vmatpush.bf16.msra.mxu0 %v775
    %993 = vmatpush.bf16.msra.mxu0 %v767
    %994 = vmatmul.bf16.gmra.mxu0 %v79
    %v995 = vpop.f32.mrf.mxu0
    %v996 = vadd.f32 0.0, %v995
    %v997 = vpop.f32.mrf.mxu0
    %998 = vdwg.mxu0
    %999 = vmatpush.bf16.msra.mxu0 %v887
    %1000 = vmatpush.bf16.msra.mxu0 %v879
    %1001 = vmatpush.bf16.msra.mxu0 %v871
    %1002 = vmatpush.bf16.msra.mxu0 %v863
    %1003 = vmatpush.bf16.msra.mxu0 %v855
    %1004 = vmatpush.bf16.msra.mxu0 %v847
    %1005 = vmatpush.bf16.msra.mxu0 %v839
    %1006 = vmatpush.bf16.msra.mxu0 %v831
    %1007 = vmatmul.bf16.gmra.mxu0 %v80
    %v1008 = vpop.f32.mrf.mxu0
    %v1009 = vadd.f32 %v996, %v1008
    %v1010 = vpop.f32.mrf.mxu0
    %1011 = vdwg.mxu0
    %1012 = vmatpush.bf16.msra.mxu0 0
    %1013 = vmatpush.bf16.msra.mxu0 0
    %1014 = vmatpush.bf16.msra.mxu0 0
    %1015 = vmatpush.bf16.msra.mxu0 0
    %1016 = vmatpush.bf16.msra.mxu0 0
    %1017 = vmatpush.bf16.msra.mxu0 %v927
    %1018 = vmatpush.bf16.msra.mxu0 %v903
    %1019 = vmatpush.bf16.msra.mxu0 %v895
    %1020 = vmatmul.bf16.gmra.mxu0 %v920
    %v1021 = vpop.f32.mrf.mxu0
    %v1022 = vadd.f32 %v1009, %v1021
    %v1023 = vpop.f32.mrf.mxu0
    %1024 = vdwg.mxu0
    %1025 = vmatpush.bf16.msra.mxu0 %v824
    %1026 = vmatpush.bf16.msra.mxu0 %v816
    %1027 = vmatpush.bf16.msra.mxu0 %v808
    %1028 = vmatpush.bf16.msra.mxu0 %v800
    %1029 = vmatpush.bf16.msra.mxu0 %v792
    %1030 = vmatpush.bf16.msra.mxu0 %v784
    %1031 = vmatpush.bf16.msra.mxu0 %v776
    %1032 = vmatpush.bf16.msra.mxu0 %v768
    %1033 = vmatmul.bf16.gmra.mxu0 %v79
    %v1034 = vpop.f32.mrf.mxu0
    %v1035 = vadd.f32 0.0, %v1034
    %v1036 = vpop.f32.mrf.mxu0
    %1037 = vdwg.mxu0
    %1038 = vmatpush.bf16.msra.mxu0 %v888
    %1039 = vmatpush.bf16.msra.mxu0 %v880
    %1040 = vmatpush.bf16.msra.mxu0 %v872
    %1041 = vmatpush.bf16.msra.mxu0 %v864
    %1042 = vmatpush.bf16.msra.mxu0 %v856
    %1043 = vmatpush.bf16.msra.mxu0 %v848
    %1044 = vmatpush.bf16.msra.mxu0 %v840
    %1045 = vmatpush.bf16.msra.mxu0 %v832
    %1046 = vmatmul.bf16.gmra.mxu0 %v80
    %v1047 = vpop.f32.mrf.mxu0
    %v1048 = vadd.f32 %v1035, %v1047
    %v1049 = vpop.f32.mrf.mxu0
    %1050 = vdwg.mxu0
    %1051 = vmatpush.bf16.msra.mxu0 0
    %1052 = vmatpush.bf16.msra.mxu0 0
    %1053 = vmatpush.bf16.msra.mxu0 0
    %1054 = vmatpush.bf16.msra.mxu0 0
    %1055 = vmatpush.bf16.msra.mxu0 0
    %1056 = vmatpush.bf16.msra.mxu0 %v930
    %1057 = vmatpush.bf16.msra.mxu0 %v904
    %1058 = vmatpush.bf16.msra.mxu0 %v896
    %1059 = vmatmul.bf16.gmra.mxu0 %v920
    %v1060 = vpop.f32.mrf.mxu0
    %v1061 = vadd.f32 %v1048, %v1060
    %v1062 = vpop.f32.mrf.mxu0
    %1063 = vdwg.mxu0
    %1064 = vmatpush.bf16.msra.mxu0 %v825
    %1065 = vmatpush.bf16.msra.mxu0 %v817
    %1066 = vmatpush.bf16.msra.mxu0 %v809
    %1067 = vmatpush.bf16.msra.mxu0 %v801
    %1068 = vmatpush.bf16.msra.mxu0 %v793
    %1069 = vmatpush.bf16.msra.mxu0 %v785
    %1070 = vmatpush.bf16.msra.mxu0 %v777
    %1071 = vmatpush.bf16.msra.mxu0 %v769
    %1072 = vmatmul.bf16.gmra.mxu0 %v79
    %v1073 = vpop.f32.mrf.mxu0
    %v1074 = vadd.f32 0.0, %v1073
    %v1075 = vpop.f32.mrf.mxu0
    %1076 = vdwg.mxu0
    %1077 = vmatpush.bf16.msra.mxu0 %v889
    %1078 = vmatpush.bf16.msra.mxu0 %v881
    %1079 = vmatpush.bf16.msra.mxu0 %v873
    %1080 = vmatpush.bf16.msra.mxu0 %v865
    %1081 = vmatpush.bf16.msra.mxu0 %v857
    %1082 = vmatpush.bf16.msra.mxu0 %v849
    %1083 = vmatpush.bf16.msra.mxu0 %v841
    %1084 = vmatpush.bf16.msra.mxu0 %v833
    %1085 = vmatmul.bf16.gmra.mxu0 %v80
    %v1086 = vpop.f32.mrf.mxu0
    %v1087 = vadd.f32 %v1074, %v1086
    %v1088 = vpop.f32.mrf.mxu0
    %1089 = vdwg.mxu0
    %1090 = vmatpush.bf16.msra.mxu0 0
    %1091 = vmatpush.bf16.msra.mxu0 0
    %1092 = vmatpush.bf16.msra.mxu0 0
    %1093 = vmatpush.bf16.msra.mxu0 0
    %1094 = vmatpush.bf16.msra.mxu0 0
    %1095 = vmatpush.bf16.msra.mxu0 %v933
    %1096 = vmatpush.bf16.msra.mxu0 %v905
    %1097 = vmatpush.bf16.msra.mxu0 %v897
    %1098 = vmatmul.bf16.gmra.mxu0 %v920
    %v1099 = vpop.f32.mrf.mxu0
    %v1100 = vadd.f32 %v1087, %v1099
    %v1101 = vpop.f32.mrf.mxu0
    %1102 = vdwg.mxu0
    %1103 = vmatpush.bf16.msra.mxu0 %v826
    %1104 = vmatpush.bf16.msra.mxu0 %v818
    %1105 = vmatpush.bf16.msra.mxu0 %v810
    %1106 = vmatpush.bf16.msra.mxu0 %v802
    %1107 = vmatpush.bf16.msra.mxu0 %v794
    %1108 = vmatpush.bf16.msra.mxu0 %v786
    %1109 = vmatpush.bf16.msra.mxu0 %v778
    %1110 = vmatpush.bf16.msra.mxu0 %v770
    %1111 = vmatmul.bf16.gmra.mxu0 %v79
    %v1112 = vpop.f32.mrf.mxu0
    %v1113 = vadd.f32 0.0, %v1112
    %v1114 = vpop.f32.mrf.mxu0
    %1115 = vdwg.mxu0
    %1116 = vmatpush.bf16.msra.mxu0 %v890
    %1117 = vmatpush.bf16.msra.mxu0 %v882
    %1118 = vmatpush.bf16.msra.mxu0 %v874
    %1119 = vmatpush.bf16.msra.mxu0 %v866
    %1120 = vmatpush.bf16.msra.mxu0 %v858
    %1121 = vmatpush.bf16.msra.mxu0 %v850
    %1122 = vmatpush.bf16.msra.mxu0 %v842
    %1123 = vmatpush.bf16.msra.mxu0 %v834
    %1124 = vmatmul.bf16.gmra.mxu0 %v80
    %v1125 = vpop.f32.mrf.mxu0
    %v1126 = vadd.f32 %v1113, %v1125
    %v1127 = vpop.f32.mrf.mxu0
    %1128 = vdwg.mxu0
    %1129 = vmatpush.bf16.msra.mxu0 0
    %1130 = vmatpush.bf16.msra.mxu0 0
    %1131 = vmatpush.bf16.msra.mxu0 0
    %1132 = vmatpush.bf16.msra.mxu0 0
    %1133 = vmatpush.bf16.msra.mxu0 0
    %1134 = vmatpush.bf16.msra.mxu0 %v936
    %1135 = vmatpush.bf16.msra.mxu0 %v906
    %1136 = vmatpush.bf16.msra.mxu0 %v898
    %1137 = vmatmul.bf16.gmra.mxu0 %v920
    %v1138 = vpop.f32.mrf.mxu0
    %v1139 = vadd.f32 %v1126, %v1138
    %v1140 = vpop.f32.mrf.mxu0
    %1141 = vdwg.mxu0
    %1142 = vmatpush.bf16.msra.mxu0 %v827
    %1143 = vmatpush.bf16.msra.mxu0 %v819
    %1144 = vmatpush.bf16.msra.mxu0 %v811
    %1145 = vmatpush.bf16.msra.mxu0 %v803
    %1146 = vmatpush.bf16.msra.mxu0 %v795
    %1147 = vmatpush.bf16.msra.mxu0 %v787
    %1148 = vmatpush.bf16.msra.mxu0 %v779
    %1149 = vmatpush.bf16.msra.mxu0 %v771
    %1150 = vmatmul.bf16.gmra.mxu0 %v79
    %v1151 = vpop.f32.mrf.mxu0
    %v1152 = vadd.f32 0.0, %v1151
    %v1153 = vpop.f32.mrf.mxu0
    %1154 = vdwg.mxu0
    %1155 = vmatpush.bf16.msra.mxu0 %v891
    %1156 = vmatpush.bf16.msra.mxu0 %v883
    %1157 = vmatpush.bf16.msra.mxu0 %v875
    %1158 = vmatpush.bf16.msra.mxu0 %v867
    %1159 = vmatpush.bf16.msra.mxu0 %v859
    %1160 = vmatpush.bf16.msra.mxu0 %v851
    %1161 = vmatpush.bf16.msra.mxu0 %v843
    %1162 = vmatpush.bf16.msra.mxu0 %v835
    %1163 = vmatmul.bf16.gmra.mxu0 %v80
    %v1164 = vpop.f32.mrf.mxu0
    %v1165 = vadd.f32 %v1152, %v1164
    %v1166 = vpop.f32.mrf.mxu0
    %1167 = vdwg.mxu0
    %1168 = vmatpush.bf16.msra.mxu0 0
    %1169 = vmatpush.bf16.msra.mxu0 0
    %1170 = vmatpush.bf16.msra.mxu0 0
    %1171 = vmatpush.bf16.msra.mxu0 0
    %1172 = vmatpush.bf16.msra.mxu0 0
    %1173 = vmatpush.bf16.msra.mxu0 %v939
    %1174 = vmatpush.bf16.msra.mxu0 %v907
    %1175 = vmatpush.bf16.msra.mxu0 %v899
    %1176 = vmatmul.bf16.gmra.mxu0 %v920
    %v1177 = vpop.f32.mrf.mxu0
    %v1178 = vadd.f32 %v1165, %v1177
    %v1179 = vpop.f32.mrf.mxu0
    %1180 = vdwg.mxu0
    %1181 = vmatpush.bf16.msra.mxu0 %v828
    %1182 = vmatpush.bf16.msra.mxu0 %v820
    %1183 = vmatpush.bf16.msra.mxu0 %v812
    %1184 = vmatpush.bf16.msra.mxu0 %v804
    %1185 = vmatpush.bf16.msra.mxu0 %v796
    %1186 = vmatpush.bf16.msra.mxu0 %v788
    %1187 = vmatpush.bf16.msra.mxu0 %v780
    %1188 = vmatpush.bf16.msra.mxu0 %v772
    %1189 = vmatmul.bf16.gmra.mxu0 %v79
    %v1190 = vpop.f32.mrf.mxu0
    %v1191 = vadd.f32 0.0, %v1190
    %v1192 = vpop.f32.mrf.mxu0
    %1193 = vdwg.mxu0
    %1194 = vmatpush.bf16.msra.mxu0 %v892
    %1195 = vmatpush.bf16.msra.mxu0 %v884
    %1196 = vmatpush.bf16.msra.mxu0 %v876
    %1197 = vmatpush.bf16.msra.mxu0 %v868
    %1198 = vmatpush.bf16.msra.mxu0 %v860
    %1199 = vmatpush.bf16.msra.mxu0 %v852
    %1200 = vmatpush.bf16.msra.mxu0 %v844
    %1201 = vmatpush.bf16.msra.mxu0 %v836
    %1202 = vmatmul.bf16.gmra.mxu0 %v80
    %v1203 = vpop.f32.mrf.mxu0
    %v1204 = vadd.f32 %v1191, %v1203
    %v1205 = vpop.f32.mrf.mxu0
    %1206 = vdwg.mxu0
    %1207 = vmatpush.bf16.msra.mxu0 0
    %1208 = vmatpush.bf16.msra.mxu0 0
    %1209 = vmatpush.bf16.msra.mxu0 0
    %1210 = vmatpush.bf16.msra.mxu0 0
    %1211 = vmatpush.bf16.msra.mxu0 0
    %1212 = vmatpush.bf16.msra.mxu0 %v942
    %1213 = vmatpush.bf16.msra.mxu0 %v908
    %1214 = vmatpush.bf16.msra.mxu0 %v900
    %1215 = vmatmul.bf16.gmra.mxu0 %v920
    %v1216 = vpop.f32.mrf.mxu0
    %v1217 = vadd.f32 %v1204, %v1216
    %v1218 = vpop.f32.mrf.mxu0
    %1219 = vdwg.mxu0
    %1220 = vmatpush.bf16.msra.mxu0 %v829
    %1221 = vmatpush.bf16.msra.mxu0 %v821
    %1222 = vmatpush.bf16.msra.mxu0 %v813
    %1223 = vmatpush.bf16.msra.mxu0 %v805
    %1224 = vmatpush.bf16.msra.mxu0 %v797
    %1225 = vmatpush.bf16.msra.mxu0 %v789
    %1226 = vmatpush.bf16.msra.mxu0 %v781
    %1227 = vmatpush.bf16.msra.mxu0 %v773
    %1228 = vmatmul.bf16.gmra.mxu0 %v79
    %v1229 = vpop.f32.mrf.mxu0
    %v1230 = vadd.f32 0.0, %v1229
    %v1231 = vpop.f32.mrf.mxu0
    %1232 = vdwg.mxu0
    %1233 = vmatpush.bf16.msra.mxu0 %v893
    %1234 = vmatpush.bf16.msra.mxu0 %v885
    %1235 = vmatpush.bf16.msra.mxu0 %v877
    %1236 = vmatpush.bf16.msra.mxu0 %v869
    %1237 = vmatpush.bf16.msra.mxu0 %v861
    %1238 = vmatpush.bf16.msra.mxu0 %v853
    %1239 = vmatpush.bf16.msra.mxu0 %v845
    %1240 = vmatpush.bf16.msra.mxu0 %v837
    %1241 = vmatmul.bf16.gmra.mxu0 %v80
    %v1242 = vpop.f32.mrf.mxu0
    %v1243 = vadd.f32 %v1230, %v1242
    %v1244 = vpop.f32.mrf.mxu0
    %1245 = vdwg.mxu0
    %1246 = vmatpush.bf16.msra.mxu0 0
    %1247 = vmatpush.bf16.msra.mxu0 0
    %1248 = vmatpush.bf16.msra.mxu0 0
    %1249 = vmatpush.bf16.msra.mxu0 0
    %1250 = vmatpush.bf16.msra.mxu0 0
    %1251 = vmatpush.bf16.msra.mxu0 %v945
    %1252 = vmatpush.bf16.msra.mxu0 %v909
    %1253 = vmatpush.bf16.msra.mxu0 %v901
    %1254 = vmatmul.bf16.gmra.mxu0 %v920
    %v1255 = vpop.f32.mrf.mxu0
    %v1256 = vadd.f32 %v1243, %v1255
    %v1257 = vpop.f32.mrf.mxu0
    %1258 = vdwg.mxu0
    %v1259 = vld [vmem:[#allocation7] sm:$0xff]
    %v1261 = vperm.slane %v1259, 0
    %v1262 = vperm.slane %v1259, 1
    %v1263 = vperm.slane %v1259, 2
    %v1264 = vperm.slane %v1259, 3
    %v1265 = vperm.slane %v1259, 4
    %v1266 = vperm.slane %v1259, 5
    %v1267 = vperm.slane %v1259, 6
    %v1268 = vperm.slane %v1259, 7
    %v1277 = vmul.f32 %v983, %v1261
    %v1278 = vmul.f32 %v1022, %v1262
    %v1279 = vmul.f32 %v1061, %v1263
    %v1280 = vmul.f32 %v1100, %v1264
    %v1281 = vmul.f32 %v1139, %v1265
    %v1282 = vmul.f32 %v1178, %v1266
    %v1283 = vmul.f32 %v1217, %v1267
    %v1284 = vmul.f32 %v1256, %v1268
    %v1285 = vld [vmem:[#allocation8] sm:$0xff]
    %v1287 = vperm.slane %v1285, 0
    %v1288 = vperm.slane %v1285, 1
    %v1289 = vperm.slane %v1285, 2
    %v1290 = vperm.slane %v1285, 3
    %v1291 = vperm.slane %v1285, 4
    %v1292 = vperm.slane %v1285, 5
    %v1293 = vperm.slane %v1285, 6
    %v1294 = vperm.slane %v1285, 7
    %v1303 = vadd.f32 %v1277, %v1287
    %v1304 = vadd.f32 %v1278, %v1288
    %v1305 = vadd.f32 %v1279, %v1289
    %v1306 = vadd.f32 %v1280, %v1290
    %v1307 = vadd.f32 %v1281, %v1291
    %v1308 = vadd.f32 %v1282, %v1292
    %v1309 = vadd.f32 %v1283, %v1293
    %v1310 = vadd.f32 %v1284, %v1294
    %1311 = vst [vmem:[#allocation10] sm:$0xff] %v1303
    %1312 = vst [vmem:[#allocation10 + $0x8] sm:$0xff] %v1304
    %1313 = vst [vmem:[#allocation10 + $0x10] sm:$0xff] %v1305
    %1314 = vst [vmem:[#allocation10 + $0x18] sm:$0xff] %v1306
    %1315 = vst [vmem:[#allocation10 + $0x20] sm:$0xff] %v1307
    %1316 = vst [vmem:[#allocation10 + $0x28] sm:$0xff] %v1308
    %1317 = vst [vmem:[#allocation10 + $0x30] sm:$0xff] %v1309
    %1318 = vst [vmem:[#allocation10 + $0x38] sm:$0xff] %v1310
    // Predicated region
    $region34: #{tpu_custom_call.1} parent=1 // pred_check
      _
    $region35: #{tpu_custom_call.1} parent=1 // pred_check_branch
      %1320 = sbr.rel (0) target = $region37
    $region36: #{tpu_custom_call.1} parent=1 // pred_region
      %1322 = vsyncadd [#allocation4], 0
      %s1324 = sshll.u32 [#allocation10], 4
      %s1325 = int_to_ptr.vmem [resolvable:$true] %s1324
      %s1326 = sshll.u32 %s4, 4
      %s1327 = int_to_ptr.hbm [resolvable:$true] %s1326
      %1329 = dma.vmem_to_hbm [thread:$0]  %s1325, 1024, %s1327, [#allocation4]
    $region37: #{tpu_custom_call.1} parent=1 // pred_fallthru
      _
    // Predicated region
    $region38: #{tpu_custom_call.1} parent=1 // pred_check
      _
    $region39: #{tpu_custom_call.1} parent=1 // pred_check_branch
      %1331 = sbr.rel (0) target = $region41
    $region40: #{tpu_custom_call.1} parent=1 // pred_region
      %1333 = dma.done [#allocation4], 1024
    $region41: #{tpu_custom_call.1} parent=1 // pred_fallthru
      _
    %1334 = vsyncpa [#allocation3], 1
    %1335 = vsyncpa [#allocation6], 1
    %1336 = vsyncpa [#allocation9], 1
    %1337 = vsyncpa [#allocation4], 1

</llo_original>
